<compile_context>
chip_gen: v5e
topology: v5e:2x2
jax: 0.10.0
libtpu: 0.0.40
codegen_flags: <defaults>
</compile_context>

<pallas_src>
from functools import partial

import numpy as np
import jax
import jax.numpy as jnp
from jax.experimental import pallas as pl
from jax.experimental.pallas import tpu as pltpu


def _round_up(x, m):
    return (x + m - 1) // m * m


def _choose_tiling(n):
    """Pick (tile_rows, padded_rows): >=2 grid steps (v7x has 2 TensorCores) while
    keeping tiles large (<=1024 rows) so single-TC v5e/v6e amortize the ~0.35us
    per-grid-step overhead."""
    n = max(n, 16)
    tm = min(1024, _round_up(pl.cdiv(n, 2), 16))   # 16: bf16 sublane packing
    n_pad = _round_up(n, tm)
    if n_pad // tm < 2:
        n_pad = 2 * tm
    return tm, n_pad


# -----------------------------------------------------------------------------
# Fused Pallas kernel: detection head + DETR post-processing (normalized boxes)
#   x_ref    : (TM, 48)   bf16 patch tokens (raw pixels; 1/255 folded into W1)
#   w1_ref   : (48, 128)  bf16     b1_ref : (1, 128) f32
#   w2_ref   : (128, 128) bf16 (cols [0:C]=class head, [C:C+4]=box head, rest 0)
#   b2_ref   : (1, 128)   f32
#   mbox_ref : (128, 8)   f32 constant: sigmoid(z) @ Mbox -> lanes 2..5 = x,y,w,h
#   out_ref  : (TM, 8)    f32 rows [class_id, score, x, y, w, h, 0, 0]
# -----------------------------------------------------------------------------
def fused_det_kernel(x_ref, w1_ref, b1_ref, w2_ref, b2_ref, mbox_ref, out_ref,
                     *, num_classes):
    C = num_classes

    # MLP trunk (bf16 MXU operands, f32 accumulation)
    h = jnp.dot(x_ref[...], w1_ref[...],
                preferred_element_type=jnp.float32) + b1_ref[...]
    h = jnp.maximum(h, 0.0)                                       # f32 (v5e-safe)
    z = jnp.dot(h.astype(jnp.bfloat16), w2_ref[...],
                preferred_element_type=jnp.float32) + b2_ref[...]  # (TM, 128) f32

    lane = jax.lax.broadcasted_iota(jnp.int32, z.shape, 1)        # (TM, 128)

    # --- class head: max/argmax on RAW logits (sigmoid is monotone) -----------
    z_cls = jnp.where(lane < C, z, jnp.float32(-1e30))
    max_logit = jnp.max(z_cls, axis=-1, keepdims=True)            # (TM, 1)
    lane_f = lane.astype(jnp.float32)
    labels = jnp.min(jnp.where(z_cls >= max_logit, lane_f, jnp.float32(C)),
                     axis=-1, keepdims=True)                      # first argmax
    score = jax.nn.sigmoid(max_logit)                             # (TM, 1)

    # --- box head: sigmoid + constant affine/selection matmul (idle MXU) ------
    sig = jax.nn.sigmoid(z)                                       # f32
    box8 = jnp.dot(sig, mbox_ref[...],
                   preferred_element_type=jnp.float32)            # (TM, 8) normalized

    # compose 8-lane output row: [class, score, x, y, w, h, 0, 0]
    lane8 = jax.lax.broadcasted_iota(jnp.int32, box8.shape, 1)
    out = jnp.where(lane8 == 0, labels, jnp.where(lane8 == 1, score, box8))
    out_ref[...] = out


@partial(jax.jit, static_argnames=("num_classes", "tm"))
def _run_pipeline(tok_pad, w1, b1, w2, b2, mbox, *, num_classes, tm):
    n_pad, d_in = tok_pad.shape
    grid = (n_pad // tm,)
    kernel = partial(fused_det_kernel, num_classes=num_classes)
    return pl.pallas_call(
        kernel,
        out_shape=jax.ShapeDtypeStruct((n_pad, 8), jnp.float32),
        grid=grid,
        in_specs=[
            pl.BlockSpec((tm, d_in), lambda i: (i, 0)),    # tokens (pipelined)
            pl.BlockSpec((d_in, 128), lambda i: (0, 0)),   # W1 (resident)
            pl.BlockSpec((1, 128), lambda i: (0, 0)),      # b1
            pl.BlockSpec((128, 128), lambda i: (0, 0)),    # W2 = [Wc|Wb] padded
            pl.BlockSpec((1, 128), lambda i: (0, 0)),      # b2
            pl.BlockSpec((128, 8), lambda i: (0, 0)),      # Mbox (constant, resident)
        ],
        out_specs=pl.BlockSpec((tm, 8), lambda i: (i, 0)),
        compiler_params=pltpu.CompilerParams(
            dimension_semantics=("parallel",),             # shard rows across TCs (v7x)
            vmem_limit_bytes=32 * 1024 * 1024,             # safe on 64 MiB v7x VMEM
        ),
    )(tok_pad, w1, b1, w2, b2, mbox)


# -----------------------------------------------------------------------------
# Wrapper: ObjectDetector.forward
# -----------------------------------------------------------------------------
class ObjectDetector:
    H_PAD = 128   # padded hidden dim
    O_PAD = 128   # padded fused-head output dim (C + 4 <= 128)

    def __init__(self, *, num_classes=5, hidden=32, patch=4, conf_thresh=0.3,
                 key=jax.random.PRNGKey(0)):
        self.num_classes = num_classes
        self.hidden = hidden
        self.patch = patch
        self.conf_thresh = conf_thresh

        d_in = 3 * patch * patch            # 48 for patch=4 (kept un-padded)
        assert hidden <= self.H_PAD and num_classes + 4 <= self.O_PAD
        assert d_in <= 128
        self.d_in = d_in

        k1, k2, k3 = jax.random.split(key, 3)
        s = 0.1
        w1 = jax.random.normal(k1, (d_in, hidden), jnp.float32) * s
        wc = jax.random.normal(k2, (hidden, num_classes), jnp.float32) * s
        wb = jax.random.normal(k3, (hidden, 4), jnp.float32) * s
        b1 = jnp.zeros((hidden,), jnp.float32)
        bc = jnp.zeros((num_classes,), jnp.float32)
        bb = jnp.zeros((4,), jnp.float32)

        # Fold 1/255 pre-processing scale into W1; pad hidden to 128;
        # fuse class + box heads into a single 128-lane-padded weight.
        w1p = jnp.zeros((d_in, self.H_PAD), jnp.float32)
        w1p = w1p.at[:, :hidden].set(w1 * (1.0 / 255.0))
        b1p = jnp.zeros((1, self.H_PAD), jnp.float32).at[0, :hidden].set(b1)

        w2p = jnp.zeros((self.H_PAD, self.O_PAD), jnp.float32)
        w2p = w2p.at[:hidden, :num_classes].set(wc)
        w2p = w2p.at[:hidden, num_classes:num_classes + 4].set(wb)
        b2p = jnp.zeros((1, self.O_PAD), jnp.float32)
        b2p = b2p.at[0, :num_classes].set(bc)
        b2p = b2p.at[0, num_classes:num_classes + 4].set(bb)

        self.w1p = w1p.astype(jnp.bfloat16)
        self.w2p = w2p.astype(jnp.bfloat16)
        self.b1p = b1p
        self.b2p = b2p

        # Constant cxcywh->xywh selection/affine matrix (kept f32 for box precision):
        # sigmoid(z) @ Mbox -> lanes 2..5 = {cx - 0.5*w, cy - 0.5*h, w, h}
        C = num_classes
        mbox = np.zeros((self.O_PAD, 8), np.float32)
        mbox[C + 0, 2] = 1.0
        mbox[C + 2, 2] = -0.5
        mbox[C + 1, 3] = 1.0
        mbox[C + 3, 3] = -0.5
        mbox[C + 2, 4] = 1.0
        mbox[C + 3, 5] = 1.0
        self.mbox = jnp.asarray(mbox)

    # ---- pre-processor (glue): stack + record original sizes ----
    def _pre_process(self, images):
        # TODO(synk): kornia ResizePreProcessor's ragged bilinear resize is not
        # implemented; images are assumed already target-sized.
        imgs = jnp.stack(images, axis=0).astype(jnp.float32)       # (B, 3, H, W)
        sizes = jnp.array([[im.shape[-2], im.shape[-1]] for im in images],
                          jnp.float32)                             # (B, 2) = (H, W)
        return imgs, sizes

    # ---- fused model + post-processor: one Pallas call, no host sync ----
    def detect(self, images):
        imgs, sizes = self._pre_process(images)
        B, Cin, H, W = imgs.shape
        P = self.patch
        qh, qw = H // P, W // P
        q = qh * qw
        N = B * q

        # patchify (layout glue, plain JAX) -> (N, 48) bf16, no lane padding
        tok = imgs.reshape(B, Cin, qh, P, qw, P)
        tok = tok.transpose(0, 2, 4, 1, 3, 5).reshape(N, self.d_in)
        tok = tok.astype(jnp.bfloat16)

        tm, n_pad = _choose_tiling(N)
        tok_pad = jnp.pad(tok, ((0, n_pad - N), (0, 0)))

        out = _run_pipeline(tok_pad, self.w1p, self.b1p, self.w2p, self.b2p,
                            self.mbox, num_classes=self.num_classes, tm=tm)
        dets = out[:N, :6].reshape(B, q, 6)                    # normalized boxes

        # scale normalized xywh by original (H, W) on the tiny (B, Q, 6) result
        Ws = sizes[:, 1]
        Hs = sizes[:, 0]
        ones = jnp.ones_like(Ws)
        scale = jnp.stack([ones, ones, Ws, Hs, Ws, Hs], axis=-1)  # (B, 6)
        return dets * scale[:, None, :]                        # (B, Q, 6) on device

    # ---- dynamic-length confidence filtering (host-side glue) ----
    def filter_detections(self, dets):
        # TODO(synk): data-dependent output lengths have no static-shape Pallas
        # equivalent; done on host (kept out of the device hot path).
        dets_np = np.asarray(dets)
        out = []
        for i in range(dets_np.shape[0]):
            mask = dets_np[i, :, 1] >= self.conf_thresh
            out.append(dets_np[i][mask])                       # (D_i, 6)
        return out

    def forward(self, images):
        return self.filter_detections(self.detect(images))


if __name__ == "__main__":
    key = jax.random.PRNGKey(0)
    k_img, k_par = jax.random.split(key)

    B, H, W = 2, 16, 16
    batch = jax.random.uniform(k_img, (B, 3, H, W), jnp.float32,
                               minval=0.0, maxval=255.0)
    images = [batch[i] for i in range(B)]                      # list of (3, H, W)

    detector = ObjectDetector(num_classes=5, hidden=32, patch=4,
                              conf_thresh=0.3, key=k_par)

    dets_dev = detector.detect(images)                         # (B, Q, 6), device
    dets_dev = jax.block_until_ready(dets_dev)
    Q = (H // 4) * (W // 4)
    assert dets_dev.shape == (B, Q, 6)
    assert bool(jnp.all(jnp.isfinite(dets_dev)))
    assert bool(jnp.all((dets_dev[..., 1] >= 0.0) & (dets_dev[..., 1] <= 1.0)))  # scores
    assert bool(jnp.all((dets_dev[..., 0] >= 0.0) & (dets_dev[..., 0] < 5.0)))   # class ids

    detections = detector.filter_detections(dets_dev)          # kornia semantics
    assert len(detections) == B
    for d in detections:
        assert d.ndim == 2 and d.shape[1] == 6

    print("KERNEL_OK")
</pallas_src>

<mosaic_0001>
module attributes {stable_mosaic.version = 11 : i64} {
  func.func @fused_det_kernel(%arg0: i32, %arg1: memref<16x48xbf16, #tpu.memory_space<vmem>>, %arg2: memref<48x128xbf16, #tpu.memory_space<vmem>>, %arg3: memref<1x128xf32, #tpu.memory_space<vmem>>, %arg4: memref<128x128xbf16, #tpu.memory_space<vmem>>, %arg5: memref<1x128xf32, #tpu.memory_space<vmem>>, %arg6: memref<128x8xf32, #tpu.memory_space<vmem>>, %arg7: memref<16x8xf32, #tpu.memory_space<vmem>>) attributes {dimension_semantics = [#tpu.dimension_semantics<parallel>], iteration_bounds = array<i64: 2>, scalar_prefetch = 0 : i64, scratch_operands = 0 : i64, tpu.core_type = #tpu.core_type<tc>, window_params = [{transform_indices = @transform_0, window_bounds = array<i64: 16, 48>}, {pipeline_mode = #tpu.pipeline_mode<synchronous>, transform_indices = @transform_1, window_bounds = array<i64: 48, 128>}, {pipeline_mode = #tpu.pipeline_mode<synchronous>, transform_indices = @transform_2, window_bounds = array<i64: 1, 128>}, {pipeline_mode = #tpu.pipeline_mode<synchronous>, transform_indices = @transform_3, window_bounds = array<i64: 128, 128>}, {pipeline_mode = #tpu.pipeline_mode<synchronous>, transform_indices = @transform_4, window_bounds = array<i64: 1, 128>}, {pipeline_mode = #tpu.pipeline_mode<synchronous>, transform_indices = @transform_5, window_bounds = array<i64: 128, 8>}, {transform_indices = @transform_6, window_bounds = array<i64: 16, 8>}]} {
    %c0 = arith.constant 0 : index
    %c0_0 = arith.constant 0 : index
    %0 = vector.load %arg1[%c0, %c0_0] : memref<16x48xbf16, #tpu.memory_space<vmem>>, vector<16x48xbf16>
    %c0_1 = arith.constant 0 : index
    %c0_2 = arith.constant 0 : index
    %1 = vector.load %arg2[%c0_1, %c0_2] : memref<48x128xbf16, #tpu.memory_space<vmem>>, vector<48x128xbf16>
    %cst = arith.constant dense<0.000000e+00> : vector<16x128xf32>
    %2 = tpu.matmul %0, %1, %cst {dimension_numbers = #tpu.dot_dimension_numbers<[1], [0], [0], [1], [0, 0, 1, 1], [], []>} : vector<16x48xbf16>, vector<48x128xbf16>, vector<16x128xf32> -> vector<16x128xf32>
    %c0_3 = arith.constant 0 : index
    %c0_4 = arith.constant 0 : index
    %3 = vector.load %arg3[%c0_3, %c0_4] : memref<1x128xf32, #tpu.memory_space<vmem>>, vector<1x128xf32>
    %4 = vector.broadcast %3 : vector<1x128xf32> to vector<16x128xf32>
    %5 = arith.addf %2, %4 : vector<16x128xf32>
    %cst_5 = arith.constant 0.000000e+00 : f32
    %6 = vector.broadcast %cst_5 : f32 to vector<16x128xf32>
    %7 = arith.maximumf %5, %6 : vector<16x128xf32>
    %8 = arith.truncf %7 : vector<16x128xf32> to vector<16x128xbf16>
    %c0_6 = arith.constant 0 : index
    %c0_7 = arith.constant 0 : index
    %9 = vector.load %arg4[%c0_6, %c0_7] : memref<128x128xbf16, #tpu.memory_space<vmem>>, vector<128x128xbf16>
    %cst_8 = arith.constant dense<0.000000e+00> : vector<16x128xf32>
    %10 = tpu.matmul %8, %9, %cst_8 {dimension_numbers = #tpu.dot_dimension_numbers<[1], [0], [0], [1], [0, 0, 1, 1], [], []>} : vector<16x128xbf16>, vector<128x128xbf16>, vector<16x128xf32> -> vector<16x128xf32>
    %c0_9 = arith.constant 0 : index
    %c0_10 = arith.constant 0 : index
    %11 = vector.load %arg5[%c0_9, %c0_10] : memref<1x128xf32, #tpu.memory_space<vmem>>, vector<1x128xf32>
    %12 = vector.broadcast %11 : vector<1x128xf32> to vector<16x128xf32>
    %13 = arith.addf %10, %12 : vector<16x128xf32>
    %14 = tpu.iota {dimensions = array<i32: 1>} : vector<16x128xi32>
    %c5_i32 = arith.constant 5 : i32
    %15 = vector.broadcast %c5_i32 : i32 to vector<16x128xi32>
    %16 = arith.cmpi slt, %14, %15 : vector<16x128xi32>
    %cst_11 = arith.constant -1.000000e+30 : f32
    %17 = vector.broadcast %cst_11 : f32 to vector<16x128xf32>
    %18 = arith.select %16, %13, %17 : vector<16x128xi1>, vector<16x128xf32>
    %cst_12 = arith.constant dense<0xFF800000> : vector<16xf32>
    %19 = vector.multi_reduction <maximumf>, %18, %cst_12 [1] : vector<16x128xf32> to vector<16xf32>
    %20 = vector.shape_cast %19 : vector<16xf32> to vector<16x1xf32>
    %21 = arith.sitofp %14 : vector<16x128xi32> to vector<16x128xf32>
    %22 = vector.broadcast %20 : vector<16x1xf32> to vector<16x128xf32>
    %23 = arith.cmpf oge, %18, %22 : vector<16x128xf32>
    %cst_13 = arith.constant 5.000000e+00 : f32
    %24 = vector.broadcast %cst_13 : f32 to vector<16x128xf32>
    %25 = arith.select %23, %21, %24 : vector<16x128xi1>, vector<16x128xf32>
    %cst_14 = arith.constant dense<0x7F800000> : vector<16xf32>
    %26 = vector.multi_reduction <minimumf>, %25, %cst_14 [1] : vector<16x128xf32> to vector<16xf32>
    %27 = vector.shape_cast %26 : vector<16xf32> to vector<16x1xf32>
    %28 = arith.negf %20 : vector<16x1xf32>
    %29 = math.exp %28 : vector<16x1xf32>
    %cst_15 = arith.constant 1.000000e+00 : f32
    %30 = vector.broadcast %cst_15 : f32 to vector<16x1xf32>
    %31 = arith.addf %30, %29 : vector<16x1xf32>
    %32 = arith.divf %30, %31 : vector<16x1xf32>
    %33 = arith.negf %13 : vector<16x128xf32>
    %34 = math.exp %33 : vector<16x128xf32>
    %cst_16 = arith.constant 1.000000e+00 : f32
    %35 = vector.broadcast %cst_16 : f32 to vector<16x128xf32>
    %36 = arith.addf %35, %34 : vector<16x128xf32>
    %37 = arith.divf %35, %36 : vector<16x128xf32>
    %c0_17 = arith.constant 0 : index
    %c0_18 = arith.constant 0 : index
    %38 = vector.load %arg6[%c0_17, %c0_18] : memref<128x8xf32, #tpu.memory_space<vmem>>, vector<128x8xf32>
    %cst_19 = arith.constant dense<0.000000e+00> : vector<16x8xf32>
    %39 = tpu.matmul %37, %38, %cst_19 {dimension_numbers = #tpu.dot_dimension_numbers<[1], [0], [0], [1], [0, 0, 1, 1], [], []>} : vector<16x128xf32>, vector<128x8xf32>, vector<16x8xf32> -> vector<16x8xf32>
    %40 = tpu.iota {dimensions = array<i32: 1>} : vector<16x8xi32>
    %c0_i32 = arith.constant 0 : i32
    %41 = vector.broadcast %c0_i32 : i32 to vector<16x8xi32>
    %42 = arith.cmpi eq, %40, %41 : vector<16x8xi32>
    %c1_i32 = arith.constant 1 : i32
    %43 = vector.broadcast %c1_i32 : i32 to vector<16x8xi32>
    %44 = arith.cmpi eq, %40, %43 : vector<16x8xi32>
    %45 = vector.shape_cast %32 : vector<16x1xf32> to vector<16x1xf32>
    %46 = vector.broadcast %45 : vector<16x1xf32> to vector<16x8xf32>
    %47 = arith.select %44, %46, %39 : vector<16x8xi1>, vector<16x8xf32>
    %48 = vector.shape_cast %27 : vector<16x1xf32> to vector<16x1xf32>
    %49 = vector.broadcast %48 : vector<16x1xf32> to vector<16x8xf32>
    %50 = arith.select %42, %49, %47 : vector<16x8xi1>, vector<16x8xf32>
    %c0_20 = arith.constant 0 : index
    %c0_21 = arith.constant 0 : index
    %51 = vector.load %arg7[%c0_20, %c0_21] : memref<16x8xf32, #tpu.memory_space<vmem>>, vector<16x8xf32>
    tpu.vector_store %arg7[%c0_20, %c0_21], %50 {strides = array<i32>} : memref<16x8xf32, #tpu.memory_space<vmem>>, vector<16x8xf32>,
    return
  }
  func.func @transform_0(%arg0: i32) -> (i32, i32) {
    %c0_i32 = arith.constant 0 : i32
    %c0_i32_0 = arith.constant 0 : i32
    return %arg0, %c0_i32 : i32, i32
  }
  func.func @transform_1(%arg0: i32) -> (i32, i32) {
    %c0_i32 = arith.constant 0 : i32
    %c0_i32_0 = arith.constant 0 : i32
    %c0_i32_1 = arith.constant 0 : i32
    return %c0_i32, %c0_i32_0 : i32, i32
  }
  func.func @transform_2(%arg0: i32) -> (i32, i32) {
    %c0_i32 = arith.constant 0 : i32
    %c0_i32_0 = arith.constant 0 : i32
    %c0_i32_1 = arith.constant 0 : i32
    return %c0_i32, %c0_i32_0 : i32, i32
  }
  func.func @transform_3(%arg0: i32) -> (i32, i32) {
    %c0_i32 = arith.constant 0 : i32
    %c0_i32_0 = arith.constant 0 : i32
    %c0_i32_1 = arith.constant 0 : i32
    return %c0_i32, %c0_i32_0 : i32, i32
  }
  func.func @transform_4(%arg0: i32) -> (i32, i32) {
    %c0_i32 = arith.constant 0 : i32
    %c0_i32_0 = arith.constant 0 : i32
    %c0_i32_1 = arith.constant 0 : i32
    return %c0_i32, %c0_i32_0 : i32, i32
  }
  func.func @transform_5(%arg0: i32) -> (i32, i32) {
    %c0_i32 = arith.constant 0 : i32
    %c0_i32_0 = arith.constant 0 : i32
    %c0_i32_1 = arith.constant 0 : i32
    return %c0_i32, %c0_i32_0 : i32, i32
  }
  func.func @transform_6(%arg0: i32) -> (i32, i32) {
    %c0_i32 = arith.constant 0 : i32
    %c0_i32_0 = arith.constant 0 : i32
    return %arg0, %c0_i32 : i32, i32
  }
}

</mosaic_0001>

<llo_original>
// kernel: _run_pipeline.1
$region0: #{_run_pipeline.1}
  #allocation0 [shape = 'u32[]', space=smem, size = 0x4, offset = 0x4, fixed_abs, tag = 'smem constant byte address 0x4 - core index']
  #allocation1 [shape = 'u32[72,128]{1,0:T(1,128)}', space=vmem, size = 0x9000, scoped, tag = 'internal scratch']
  %s0 = inlined_call_operand.vmem [shape: bf16[32,48], index: 0, kind: input, shape index: {}]
  %s1 = inlined_call_operand.vmem [shape: bf16[48,128], index: 1, kind: input, shape index: {}]
  %s2 = inlined_call_operand.vmem [shape: f32[1,128], index: 2, kind: input, shape index: {}]
  %s3 = inlined_call_operand.vmem [shape: bf16[128,128], index: 3, kind: input, shape index: {}]
  %s4 = inlined_call_operand.vmem [shape: f32[1,128], index: 4, kind: input, shape index: {}]
  %s5 = inlined_call_operand.vmem [shape: f32[128,8], index: 5, kind: input, shape index: {}]
  %s6 = inlined_call_operand.vmem [shape: f32[32,8], index: 6, kind: output, shape index: {}]
  %s7 = sld [smem:[#allocation0]]
  $region57: #{_run_pipeline.1} parent=0
    _
  %s9 = ssub.s32 1, %s7
  %s10 = scalar_select 0, %s9, %s7
  loop: start=0, step=1, limit=4
  $region2: #{_run_pipeline.1} parent=0 // loop_pre_header
    _
  $region3: #{_run_pipeline.1} parent=0 // loop_header
    %s12 = sphi 0, %s16
    %p13 = scmp.ge.s32.totalorder %s12, 4
    %s22 = sphi 0, %s24
    %s25 = sphi 0, %s22
    %s26 = sphi 0, %s25
    %s42 = sphi 0, %s26
    %s46 = sphi 0, %s46
    %s48 = sphi 0, %s46
    %s49 = sphi 0, %s48
    %s63 = sphi 0, %s49
    %s67 = sphi 0, %s67
    %s69 = sphi 0, %s67
    %s70 = sphi 0, %s69
    %s84 = sphi 0, %s70
    %s88 = sphi 0, %s88
    %s90 = sphi 0, %s88
    %s91 = sphi 0, %s90
    %s105 = sphi 0, %s91
    %s109 = sphi 0, %s109
    %s111 = sphi 0, %s109
    %s112 = sphi 0, %s111
    %s126 = sphi 0, %s112
    %s130 = sphi 0, %s130
    %s132 = sphi 0, %s130
    %s133 = sphi 0, %s132
    %s147 = sphi 0, %s133
    %s153 = sphi 0, %s155
    %s156 = sphi 0, %s153
    %s157 = sphi 0, %s156
    %s173 = sphi 0, %s157
  $region4: #{_run_pipeline.1} parent=0 // loop_header_branch
    %15 = sbr.rel (%p13) target = $region8
  $region5: #{_run_pipeline.1} parent=0 // loop_body
    %s17 = ssub.s32 %s12, 1
    %s18 = ssub.s32 %s12, 2
    %s19 = sadd.s32 %s12, 1
    %s20 = ssub.s32 %s12, %s19
    %p21 = scmp.eq.s32.totalorder %s20, 0
    %s23 = sadd.s32 %s22, 1
    %s24 = scalar_select %p21, %s22, %s23
    %p27 = pneg %p21
    %p28 = scmp.eq.s32.totalorder %s12, 1
    %p29 = por %p27, %p28
    %p30 = scmp.ne.s32.totalorder %s22, %s25
    %p31 = scmp.eq.s32.totalorder %s12, 0
    %p32 = por %p30, %p31
    %p33 = scmp.ne.s32.totalorder %s22, %s25
    %p34 = scmp.eq.s32.totalorder %s17, 1
    %p35 = por %p33, %p34
    %p36 = scmp.ne.s32.totalorder %s25, %s26
    %p37 = scmp.eq.s32.totalorder %s17, 0
    %p38 = por %p36, %p37
    %p39 = scmp.ne.s32.totalorder %s25, %s26
    %p40 = scmp.eq.s32.totalorder %s18, 1
    %p41 = por %p39, %p40
    %p43 = scmp.ne.s32.totalorder %s26, %s42
    %p44 = scmp.eq.s32.totalorder %s18, 0
    %p45 = por %p43, %p44
    %s47 = sadd.s32 %s46, 1
    %p50 = scmp.eq.s32.totalorder %s12, 1
    %p51 = scmp.ne.s32.totalorder %s46, %s48
    %p52 = scmp.eq.s32.totalorder %s12, 0
    %p53 = por %p51, %p52
    %p54 = scmp.ne.s32.totalorder %s46, %s48
    %p55 = scmp.eq.s32.totalorder %s17, 1
    %p56 = por %p54, %p55
    %p57 = scmp.ne.s32.totalorder %s48, %s49
    %p58 = scmp.eq.s32.totalorder %s17, 0
    %p59 = por %p57, %p58
    %p60 = scmp.ne.s32.totalorder %s48, %s49
    %p61 = scmp.eq.s32.totalorder %s18, 1
    %p62 = por %p60, %p61
    %p64 = scmp.ne.s32.totalorder %s49, %s63
    %p65 = scmp.eq.s32.totalorder %s18, 0
    %p66 = por %p64, %p65
    %s68 = sadd.s32 %s67, 1
    %p71 = scmp.eq.s32.totalorder %s12, 1
    %p72 = scmp.ne.s32.totalorder %s67, %s69
    %p73 = scmp.eq.s32.totalorder %s12, 0
    %p74 = por %p72, %p73
    %p75 = scmp.ne.s32.totalorder %s67, %s69
    %p76 = scmp.eq.s32.totalorder %s17, 1
    %p77 = por %p75, %p76
    %p78 = scmp.ne.s32.totalorder %s69, %s70
    %p79 = scmp.eq.s32.totalorder %s17, 0
    %p80 = por %p78, %p79
    %p81 = scmp.ne.s32.totalorder %s69, %s70
    %p82 = scmp.eq.s32.totalorder %s18, 1
    %p83 = por %p81, %p82
    %p85 = scmp.ne.s32.totalorder %s70, %s84
    %p86 = scmp.eq.s32.totalorder %s18, 0
    %p87 = por %p85, %p86
    %s89 = sadd.s32 %s88, 1
    %p92 = scmp.eq.s32.totalorder %s12, 1
    %p93 = scmp.ne.s32.totalorder %s88, %s90
    %p94 = scmp.eq.s32.totalorder %s12, 0
    %p95 = por %p93, %p94
    %p96 = scmp.ne.s32.totalorder %s88, %s90
    %p97 = scmp.eq.s32.totalorder %s17, 1
    %p98 = por %p96, %p97
    %p99 = scmp.ne.s32.totalorder %s90, %s91
    %p100 = scmp.eq.s32.totalorder %s17, 0
    %p101 = por %p99, %p100
    %p102 = scmp.ne.s32.totalorder %s90, %s91
    %p103 = scmp.eq.s32.totalorder %s18, 1
    %p104 = por %p102, %p103
    %p106 = scmp.ne.s32.totalorder %s91, %s105
    %p107 = scmp.eq.s32.totalorder %s18, 0
    %p108 = por %p106, %p107
    %s110 = sadd.s32 %s109, 1
    %p113 = scmp.eq.s32.totalorder %s12, 1
    %p114 = scmp.ne.s32.totalorder %s109, %s111
    %p115 = scmp.eq.s32.totalorder %s12, 0
    %p116 = por %p114, %p115
    %p117 = scmp.ne.s32.totalorder %s109, %s111
    %p118 = scmp.eq.s32.totalorder %s17, 1
    %p119 = por %p117, %p118
    %p120 = scmp.ne.s32.totalorder %s111, %s112
    %p121 = scmp.eq.s32.totalorder %s17, 0
    %p122 = por %p120, %p121
    %p123 = scmp.ne.s32.totalorder %s111, %s112
    %p124 = scmp.eq.s32.totalorder %s18, 1
    %p125 = por %p123, %p124
    %p127 = scmp.ne.s32.totalorder %s112, %s126
    %p128 = scmp.eq.s32.totalorder %s18, 0
    %p129 = por %p127, %p128
    %s131 = sadd.s32 %s130, 1
    %p134 = scmp.eq.s32.totalorder %s12, 1
    %p135 = scmp.ne.s32.totalorder %s130, %s132
    %p136 = scmp.eq.s32.totalorder %s12, 0
    %p137 = por %p135, %p136
    %p138 = scmp.ne.s32.totalorder %s130, %s132
    %p139 = scmp.eq.s32.totalorder %s17, 1
    %p140 = por %p138, %p139
    %p141 = scmp.ne.s32.totalorder %s132, %s133
    %p142 = scmp.eq.s32.totalorder %s17, 0
    %p143 = por %p141, %p142
    %p144 = scmp.ne.s32.totalorder %s132, %s133
    %p145 = scmp.eq.s32.totalorder %s18, 1
    %p146 = por %p144, %p145
    %p148 = scmp.ne.s32.totalorder %s133, %s147
    %p149 = scmp.eq.s32.totalorder %s18, 0
    %p150 = por %p148, %p149
    %s151 = ssub.s32 %s12, %s19
    %p152 = scmp.eq.s32.totalorder %s151, 0
    %s154 = sadd.s32 %s153, 1
    %s155 = scalar_select %p152, %s153, %s154
    %p158 = pneg %p152
    %p159 = scmp.eq.s32.totalorder %s12, 1
    %p160 = por %p158, %p159
    %p161 = scmp.ne.s32.totalorder %s153, %s156
    %p162 = scmp.eq.s32.totalorder %s12, 0
    %p163 = por %p161, %p162
    %p164 = scmp.ne.s32.totalorder %s153, %s156
    %p165 = scmp.eq.s32.totalorder %s17, 1
    %p166 = por %p164, %p165
    %p167 = scmp.ne.s32.totalorder %s156, %s157
    %p168 = scmp.eq.s32.totalorder %s17, 0
    %p169 = por %p167, %p168
    %p170 = scmp.ne.s32.totalorder %s156, %s157
    %p171 = scmp.eq.s32.totalorder %s18, 1
    %p172 = por %p170, %p171
    %p174 = scmp.ne.s32.totalorder %s157, %s173
    %p175 = scmp.eq.s32.totalorder %s18, 0
    %p176 = por %p174, %p175
    %p177 = scmp.le.s32.totalorder 1, %s12
    %p178 = scmp.lt.s32.totalorder %s12, 3
    %p179 = pnand %p177, %p178
    %p180 = pneg %p179
    // Predicated region
    $region9: #{_run_pipeline.1} parent=5 // pred_check
      _
    $region10: #{_run_pipeline.1} parent=5 // pred_check_branch
      %182 = sbr.rel (%p179) target = $region12
    $region11: #{_run_pipeline.1} parent=5 // pred_region
      %s183 = ssub.s32 %s12, 1
      // Predicated region
      $region13: #{_run_pipeline.1} parent=11 // pred_check
        %p184 = pneg %p59
      $region14: #{_run_pipeline.1} parent=11 // pred_check_branch
        %186 = sbr.rel (%p184) target = $region16
      $region15: #{_run_pipeline.1} parent=11 // pred_region
        _
      $region16: #{_run_pipeline.1} parent=11 // pred_fallthru
        _
      // Predicated region
      $region17: #{_run_pipeline.1} parent=11 // pred_check
        %p187 = pneg %p80
      $region18: #{_run_pipeline.1} parent=11 // pred_check_branch
        %189 = sbr.rel (%p187) target = $region20
      $region19: #{_run_pipeline.1} parent=11 // pred_region
        _
      $region20: #{_run_pipeline.1} parent=11 // pred_fallthru
        _
      // Predicated region
      $region21: #{_run_pipeline.1} parent=11 // pred_check
        %p190 = pneg %p101
      $region22: #{_run_pipeline.1} parent=11 // pred_check_branch
        %192 = sbr.rel (%p190) target = $region24
      $region23: #{_run_pipeline.1} parent=11 // pred_region
        _
      $region24: #{_run_pipeline.1} parent=11 // pred_fallthru
        _
      // Predicated region
      $region25: #{_run_pipeline.1} parent=11 // pred_check
        %p193 = pneg %p122
      $region26: #{_run_pipeline.1} parent=11 // pred_check_branch
        %195 = sbr.rel (%p193) target = $region28
      $region27: #{_run_pipeline.1} parent=11 // pred_region
        _
      $region28: #{_run_pipeline.1} parent=11 // pred_fallthru
        _
      // Predicated region
      $region29: #{_run_pipeline.1} parent=11 // pred_check
        %p196 = pneg %p143
      $region30: #{_run_pipeline.1} parent=11 // pred_check_branch
        %198 = sbr.rel (%p196) target = $region32
      $region31: #{_run_pipeline.1} parent=11 // pred_region
        _
      $region32: #{_run_pipeline.1} parent=11 // pred_fallthru
        _
    $region12: #{_run_pipeline.1} parent=5 // pred_fallthru
      _
    %p199 = scmp.lt.s32.totalorder %s12, 2
    // Predicated region
    $region33: #{_run_pipeline.1} parent=5 // pred_check
      %p200 = pneg %p199
    $region34: #{_run_pipeline.1} parent=5 // pred_check_branch
      %202 = sbr.rel (%p200) target = $region36
    $region35: #{_run_pipeline.1} parent=5 // pred_region
      // Predicated region
      $region37: #{_run_pipeline.1} parent=35 // pred_check
        %p203 = pneg %p32
      $region38: #{_run_pipeline.1} parent=35 // pred_check_branch
        %205 = sbr.rel (%p203) target = $region40
      $region39: #{_run_pipeline.1} parent=35 // pred_region
        %s206 = smul.u32 2, %s12
        %p207 = scmp.lt.s32.totalorder %s206, 3
        %s208 = scalar_select %p207, %s206, 3
        %s209 = smul.addr %s208, 4
        %s210 = scalar_lea.vmem %s0, %s209
        %s211 = smul.u32 2, %s12
      $region40: #{_run_pipeline.1} parent=35 // pred_fallthru
        _
    $region36: #{_run_pipeline.1} parent=5 // pred_fallthru
      _
    %p212 = scmp.le.s32.totalorder 1, %s12
    %p213 = scmp.lt.s32.totalorder %s12, 3
    %p214 = pnand %p212, %p213
    %p215 = pneg %p214
    // Predicated region
    $region41: #{_run_pipeline.1} parent=5 // pred_check
      _
    $region42: #{_run_pipeline.1} parent=5 // pred_check_branch
      %217 = sbr.rel (%p214) target = $region44
    $region43: #{_run_pipeline.1} parent=5 // pred_region
      %s218 = ssub.s32 %s12, 1
      %s219 = smul.u32 2, %s17
      %p220 = scmp.lt.s32.totalorder %s219, 3
      %s221 = scalar_select %p220, %s219, 3
      %s222 = smul.addr %s221, 4
      %s223 = scalar_lea.vmem %s0, %s222
      %p224 = pneg %p38
      %p225 = pneg %p35
      %p226 = pneg %p59
      %p227 = pneg %p56
      %p228 = pneg %p80
      %p229 = pneg %p77
      %p230 = pneg %p101
      %p231 = pneg %p98
      %p232 = pneg %p122
      %p233 = pneg %p119
      %p234 = pneg %p143
      %p235 = pneg %p140
      %p236 = pneg %p169
      %p237 = pneg %p166
      %s238 = smul.u32 2, %s17
      %p239 = scmp.lt.s32.totalorder %s238, 3
      %s240 = scalar_select %p239, %s238, 3
      %s241 = smul.addr %s240, 8
      %s242 = scalar_lea.vmem %s6, %s241
      %s243 = smul.u32 2, %s17
      %p244 = scmp.lt.s32.totalorder %s243, 3
      %s245 = scalar_select %p244, %s243, 3
      %s246 = smul.addr %s245, 4
      %s247 = scalar_lea.vmem %s0, %s246
      %s248 = smul.u32 2, %s17
      %s249 = smul.u32 2, %s17
      %p250 = scmp.lt.s32.totalorder %s249, 3
      %s251 = scalar_select %p250, %s249, 3
      %s252 = smul.addr %s251, 8
      %s253 = scalar_lea.vmem %s6, %s252
      %s254 = smul.u32 2, %s17
      %v256 = vld [vmem:[%s247] sm:$0xf]
      %v257 = vld [vmem:[%s247 + $0x4] sm:$0xf]
      %v258 = vld [vmem:[%s1] sm:$0xf]
      %v259 = vld [vmem:[%s1 + $0x4] sm:$0xf]
      %v260 = vld [vmem:[%s1 + $0x8] sm:$0xf]
      %v261 = vld [vmem:[%s1 + $0xc] sm:$0xf]
      %v262 = vld [vmem:[%s1 + $0x10] sm:$0xf]
      %v263 = vld [vmem:[%s1 + $0x14] sm:$0xf]
      %v264 = vld [vmem:[%s2] sm:$0x1]
      %v266 = vperm.slane %v264, 0
      %v270 = vunpack.c.l.b16 %v256
      %v271 = vunpack.c.l.b16 %v257
      %v272 = vpack.c.b16 %v271, %v270
      %v279 = vunpack.c.l.b16 %v258
      %v280 = vunpack.c.l.b16 %v259
      %v281 = vunpack.c.l.b16 %v260
      %v282 = vunpack.c.l.b16 %v261
      %v283 = vunpack.c.l.b16 %v262
      %v284 = vunpack.c.l.b16 %v263
      %v285 = vpack.c.b16 %v280, %v279
      %v286 = vpack.c.b16 %v282, %v281
      %v287 = vpack.c.b16 %v284, %v283
      %vm291 = vcmask 392192
      %v293 = vsel %vm291, %v272, 0
      %295 = vmatpush.bf16.msra.mxu0 0
      %296 = vmatpush.bf16.msra.mxu0 0
      %297 = vmatpush.bf16.msra.mxu0 0
      %298 = vmatpush.bf16.msra.mxu0 0
      %299 = vmatpush.bf16.msra.mxu0 0
      %300 = vmatpush.bf16.msra.mxu0 %v287
      %301 = vmatpush.bf16.msra.mxu0 %v286
      %302 = vmatpush.bf16.msra.mxu0 %v285
      %303 = vmatmul.bf16.gmra.mxu0 %v293
      %v304 = vpop.f32.mrf.mxu0
      %v305 = vadd.f32 %v266, %v304
      %v306 = vpop.f32.mrf.mxu0
      %v307 = vadd.f32 %v266, %v306
      %308 = vdwg.mxu0
      %v309 = vmax.f32 %v305, 0.0
      %v310 = vmax.f32 %v307, 0.0
      %v311 = vpack.c.bf16 %v310, %v309
      %v312 = vld [vmem:[%s3] sm:$0xf]
      %v313 = vld [vmem:[%s3 + $0x4] sm:$0xf]
      %v314 = vld [vmem:[%s3 + $0x8] sm:$0xf]
      %v315 = vld [vmem:[%s3 + $0xc] sm:$0xf]
      %v316 = vld [vmem:[%s3 + $0x10] sm:$0xf]
      %v317 = vld [vmem:[%s3 + $0x14] sm:$0xf]
      %v318 = vld [vmem:[%s3 + $0x18] sm:$0xf]
      %v319 = vld [vmem:[%s3 + $0x1c] sm:$0xf]
      %v320 = vld [vmem:[%s3 + $0x20] sm:$0xf]
      %v321 = vld [vmem:[%s3 + $0x24] sm:$0xf]
      %v322 = vld [vmem:[%s3 + $0x28] sm:$0xf]
      %v323 = vld [vmem:[%s3 + $0x2c] sm:$0xf]
      %v324 = vld [vmem:[%s3 + $0x30] sm:$0xf]
      %v325 = vld [vmem:[%s3 + $0x34] sm:$0xf]
      %v326 = vld [vmem:[%s3 + $0x38] sm:$0xf]
      %v327 = vld [vmem:[%s3 + $0x3c] sm:$0xf]
      %v328 = vld [vmem:[%s4] sm:$0x1]
      %v330 = vperm.slane %v328, 0
      %v348 = vunpack.c.l.b16 %v312
      %v349 = vunpack.c.l.b16 %v313
      %v350 = vunpack.c.l.b16 %v314
      %v351 = vunpack.c.l.b16 %v315
      %v352 = vunpack.c.l.b16 %v316
      %v353 = vunpack.c.l.b16 %v317
      %v354 = vunpack.c.l.b16 %v318
      %v355 = vunpack.c.l.b16 %v319
      %v356 = vunpack.c.l.b16 %v320
      %v357 = vunpack.c.l.b16 %v321
      %v358 = vunpack.c.l.b16 %v322
      %v359 = vunpack.c.l.b16 %v323
      %v360 = vunpack.c.l.b16 %v324
      %v361 = vunpack.c.l.b16 %v325
      %v362 = vunpack.c.l.b16 %v326
      %v363 = vunpack.c.l.b16 %v327
      %v364 = vpack.c.b16 %v349, %v348
      %v365 = vpack.c.b16 %v351, %v350
      %v366 = vpack.c.b16 %v353, %v352
      %v367 = vpack.c.b16 %v355, %v354
      %v368 = vpack.c.b16 %v357, %v356
      %v369 = vpack.c.b16 %v359, %v358
      %v370 = vpack.c.b16 %v361, %v360
      %v371 = vpack.c.b16 %v363, %v362
      %380 = vmatpush.bf16.msra.mxu0 %v371
      %381 = vmatpush.bf16.msra.mxu0 %v370
      %382 = vmatpush.bf16.msra.mxu0 %v369
      %383 = vmatpush.bf16.msra.mxu0 %v368
      %384 = vmatpush.bf16.msra.mxu0 %v367
      %385 = vmatpush.bf16.msra.mxu0 %v366
      %386 = vmatpush.bf16.msra.mxu0 %v365
      %387 = vmatpush.bf16.msra.mxu0 %v364
      %388 = vmatmul.bf16.gmra.mxu0 %v311
      %v389 = vpop.f32.mrf.mxu0
      %v390 = vadd.f32 %v330, %v389
      %v391 = vpop.f32.mrf.mxu0
      %v392 = vadd.f32 %v330, %v391
      %393 = vdwg.mxu0
      %v394 = vlaneseq
      %v395 = vand.u32 %v394, 127
      %vm396 = vcmp.lt.s32.totalorder %v395, 5
      %v397 = vsel %vm396, %v390, -1e+30
      %v398 = vsel %vm396, %v392, -1e+30
      %399 = vmax.xlane.f32.xlu0 %v397
      %v400 = vpop.xlane.xlu0 %399
      %401 = vmax.xlane.f32.xlu0 %v398
      %v402 = vpop.xlane.xlu0 %401
      %v403 = vcvt.s32.f32 %v395
      %vm404 = vcmp.ge.f32.partialorder %v397, %v400
      %vm405 = vcmp.ge.f32.partialorder %v398, %v402
      %v406 = vsel %vm404, %v403, 5.0
      %v407 = vsel %vm405, %v403, 5.0
      %408 = vmin.xlane.f32.xlu0 %v406
      %v409 = vpop.xlane.xlu0 %408
      %410 = vmin.xlane.f32.xlu0 %v407
      %v411 = vpop.xlane.xlu0 %410
      %v412 = vxor.u32 %v400, 2147483648
      %v413 = vxor.u32 %v402, 2147483648
      %v414 = vmul.f32 %v412, 1.442695
      %v415 = vpow.pop %v414
      %v416 = vmul.f32 %v413, 1.442695
      %v417 = vpow.pop %v416
      %v418 = vadd.f32 %v415, 1.0
      %v419 = vadd.f32 %v417, 1.0
      %v420 = vrcp.pop %v418
      %v421 = vmul.f32 %v418, %v420
      %v422 = vsub.f32 1.0, %v421
      %v423 = vmul.f32 %v420, %v422
      %v424 = vadd.f32 %v420, %v423
      %vm425 = vweird.f32 %v418
      %vm426 = vweird.f32 %v420
      %vm427 = vmor %vm425, %vm426
      %v428 = vsel %vm427, %v420, %v424
      %v429 = vand.u32 2147483647, %v418
      %vm430 = vcmp.eq.f32.partialorder %v429, 8.507059e+37
      %v431 = vand.u32 %v418, 2147483648
      %v432 = vor.u32 1.1754944e-38, %v431
      %v433 = vsel %vm430, %v432, %v428
      %v434 = vmul.f32 1.0, %v433
      %v435 = vrcp.pop %v419
      %v436 = vmul.f32 %v419, %v435
      %v437 = vsub.f32 1.0, %v436
      %v438 = vmul.f32 %v435, %v437
      %v439 = vadd.f32 %v435, %v438
      %vm440 = vweird.f32 %v419
      %vm441 = vweird.f32 %v435
      %vm442 = vmor %vm440, %vm441
      %v443 = vsel %vm442, %v435, %v439
      %v444 = vand.u32 2147483647, %v419
      %vm445 = vcmp.eq.f32.partialorder %v444, 8.507059e+37
      %v446 = vand.u32 %v419, 2147483648
      %v447 = vor.u32 1.1754944e-38, %v446
      %v448 = vsel %vm445, %v447, %v443
      %v449 = vmul.f32 1.0, %v448
      %v450 = vxor.u32 %v390, 2147483648
      %v451 = vxor.u32 %v392, 2147483648
      %v452 = vmul.f32 %v450, 1.442695
      %v453 = vpow.pop %v452
      %v454 = vmul.f32 %v451, 1.442695
      %v455 = vpow.pop %v454
      %v456 = vadd.f32 %v453, 1.0
      %v457 = vadd.f32 %v455, 1.0
      %v458 = vrcp.pop %v456
      %v459 = vmul.f32 %v456, %v458
      %v460 = vsub.f32 1.0, %v459
      %v461 = vmul.f32 %v458, %v460
      %v462 = vadd.f32 %v458, %v461
      %vm463 = vweird.f32 %v456
      %vm464 = vweird.f32 %v458
      %vm465 = vmor %vm463, %vm464
      %v466 = vsel %vm465, %v458, %v462
      %v467 = vand.u32 2147483647, %v456
      %vm468 = vcmp.eq.f32.partialorder %v467, 8.507059e+37
      %v469 = vand.u32 %v456, 2147483648
      %v470 = vor.u32 1.1754944e-38, %v469
      %v471 = vsel %vm468, %v470, %v466
      %v472 = vmul.f32 1.0, %v471
      %v473 = vrcp.pop %v457
      %v474 = vmul.f32 %v457, %v473
      %v475 = vsub.f32 1.0, %v474
      %v476 = vmul.f32 %v473, %v475
      %v477 = vadd.f32 %v473, %v476
      %vm478 = vweird.f32 %v457
      %vm479 = vweird.f32 %v473
      %vm480 = vmor %vm478, %vm479
      %v481 = vsel %vm480, %v473, %v477
      %v482 = vand.u32 2147483647, %v457
      %vm483 = vcmp.eq.f32.partialorder %v482, 8.507059e+37
      %v484 = vand.u32 %v457, 2147483648
      %v485 = vor.u32 1.1754944e-38, %v484
      %v486 = vsel %vm483, %v485, %v481
      %v487 = vmul.f32 1.0, %v486
      %v488 = vld [vmem:[%s5] sm:$0xff]
      %v489 = vld [vmem:[%s5 + $0x8] sm:$0xff]
      %v490 = vld [vmem:[%s5 + $0x10] sm:$0xff]
      %v491 = vld [vmem:[%s5 + $0x18] sm:$0xff]
      %v492 = vld [vmem:[%s5 + $0x20] sm:$0xff]
      %v493 = vld [vmem:[%s5 + $0x28] sm:$0xff]
      %v494 = vld [vmem:[%s5 + $0x30] sm:$0xff]
      %v495 = vld [vmem:[%s5 + $0x38] sm:$0xff]
      %v496 = vld [vmem:[%s5 + $0x40] sm:$0xff]
      %v497 = vld [vmem:[%s5 + $0x48] sm:$0xff]
      %v498 = vld [vmem:[%s5 + $0x50] sm:$0xff]
      %v499 = vld [vmem:[%s5 + $0x58] sm:$0xff]
      %v500 = vld [vmem:[%s5 + $0x60] sm:$0xff]
      %v501 = vld [vmem:[%s5 + $0x68] sm:$0xff]
      %v502 = vld [vmem:[%s5 + $0x70] sm:$0xff]
      %v503 = vld [vmem:[%s5 + $0x78] sm:$0xff]
      %504 = vmatpush.msra.mxu0 %v503
      %505 = vmatpush.msra.mxu0 %v502
      %506 = vmatpush.msra.mxu0 %v501
      %507 = vmatpush.msra.mxu0 %v500
      %508 = vmatpush.msra.mxu0 %v499
      %509 = vmatpush.msra.mxu0 %v498
      %510 = vmatpush.msra.mxu0 %v497
      %511 = vmatpush.msra.mxu0 %v496
      %512 = vmatpush.msra.mxu0 %v495
      %513 = vmatpush.msra.mxu0 %v494
      %514 = vmatpush.msra.mxu0 %v493
      %515 = vmatpush.msra.mxu0 %v492
      %516 = vmatpush.msra.mxu0 %v491
      %517 = vmatpush.msra.mxu0 %v490
      %518 = vmatpush.msra.mxu0 %v489
      %519 = vmatpush.msra.mxu0 %v488
      %520 = vmatmul.f32.gmra.mxu0 %v472
      %v521 = vpop.f32.mrf.mxu0
      %v522 = vadd.f32 0.0, %v521
      %523 = vmatmul.f32.gmra.mxu0 %v487
      %v524 = vpop.f32.mrf.mxu0
      %v525 = vadd.f32 0.0, %v524
      %526 = vdwg.mxu0
      %vm527 = vcmp.eq.s32.totalorder %v395, 0
      %vm528 = vcmp.eq.s32.totalorder %v395, 1
      %v529 = vsel %vm528, %v434, %v522
      %v530 = vsel %vm528, %v449, %v525
      %v531 = vsel %vm527, %v409, %v529
      %v532 = vsel %vm527, %v411, %v530
      %vm533 = vcmask 64512
      %534 = vst.msk [vmem:[%s253] sm:$0xff] %vm533, %v531
      %535 = vst.msk [vmem:[%s253 + $0x8] sm:$0xff] %vm533, %v532
      %s536 = smul.u32 2, %s17
      %p537 = scmp.lt.s32.totalorder %s536, 3
      %s538 = scalar_select %p537, %s536, 3
      %s539 = smul.addr %s538, 8
      %s540 = scalar_lea.vmem %s6, %s539
      // Predicated region
      $region45: #{_run_pipeline.1} parent=43 // pred_check
        %p541 = pneg %p166
      $region46: #{_run_pipeline.1} parent=43 // pred_check_branch
        %543 = sbr.rel (%p541) target = $region48
      $region47: #{_run_pipeline.1} parent=43 // pred_region
        %s544 = smul.u32 2, %s17
      $region48: #{_run_pipeline.1} parent=43 // pred_fallthru
        _
    $region44: #{_run_pipeline.1} parent=5 // pred_fallthru
      _
    %p545 = scmp.le.s32.totalorder 2, %s12
    // Predicated region
    $region49: #{_run_pipeline.1} parent=5 // pred_check
      %p546 = pneg %p545
    $region50: #{_run_pipeline.1} parent=5 // pred_check_branch
      %548 = sbr.rel (%p546) target = $region52
    $region51: #{_run_pipeline.1} parent=5 // pred_region
      %s549 = ssub.s32 %s12, 2
      // Predicated region
      $region53: #{_run_pipeline.1} parent=51 // pred_check
        %p550 = pneg %p172
      $region54: #{_run_pipeline.1} parent=51 // pred_check_branch
        %552 = sbr.rel (%p550) target = $region56
      $region55: #{_run_pipeline.1} parent=51 // pred_region
        %s553 = smul.u32 2, %s18
        %p554 = scmp.lt.s32.totalorder %s553, 3
        %s555 = scalar_select %p554, %s553, 3
        %s556 = smul.addr %s555, 8
        %s557 = scalar_lea.vmem %s6, %s556
      $region56: #{_run_pipeline.1} parent=51 // pred_fallthru
        _
    $region52: #{_run_pipeline.1} parent=5 // pred_fallthru
      _
  $region6: #{_run_pipeline.1} parent=0 // loop_footer
    %s16 = sadd.s32 1, %s12
  $region7: #{_run_pipeline.1} parent=0 // loop_footer_branch
    %11 = sbr.rel target = $region3
  $region8: #{_run_pipeline.1} parent=0 // loop_exit
    _

</llo_original>
